<compile_context>
chip_gen: v7x
topology: tpu7x:2x2x1
jax: 0.10.0
libtpu: 0.0.40
codegen_flags: <defaults>
</compile_context>

<pallas_src>
import math
from functools import partial

import numpy as np
import jax
import jax.numpy as jnp
from jax.experimental import pallas as pl
from jax.experimental.pallas import tpu as pltpu


def _round_up(x: int, m: int) -> int:
    return ((x + m - 1) // m) * m


def _pick_pack(d_model: int) -> int:
    """Lane-dense packing factor: pack consecutive positions into one slab row so the
    output's last dim is a multiple of 128 (unmasked full-lane stores)."""
    if d_model % 128 == 0:
        return 1
    if 128 % d_model == 0:
        return 128 // d_model                      # width == exactly 128
    pack = math.lcm(d_model, 128) // d_model       # e.g. d_model=80 -> pack=8, width=640
    return pack if pack <= 16 else 1               # rare odd d_model: masked-store fallback


def _pe_kernel(freq_ref, off_ref, o_ref, *, pack: int):
    """Writes one (tile_rows, width) block of the packed positional-encoding slab.

    Slab element (r, c) = sin(position * freq[c] + off[c]) with
      position = (block_base + r) * pack,
    where the packed-position offset (c // d_model) and the cos phase (pi/2 on odd
    features) are already folded into off[c] by the wrapper.  Per element: one mul,
    one add, one sin.  The kernel never reads o_ref (safe with a partial final block).
    """
    tile_rows = o_ref.shape[0]
    base = pl.program_id(0) * tile_rows
    row = jax.lax.broadcasted_iota(jnp.int32, (tile_rows, 1), 0) + base
    row_pos = row.astype(jnp.float32) * float(pack)
    angle = row_pos * freq_ref[...] + off_ref[...]
    o_ref[...] = jnp.sin(angle).astype(o_ref.dtype)


def positional_encoding(length: int, d_model: int = 512, out_dtype=jnp.float32) -> jax.Array:
    """Returns the (1, length, d_model) positional-encoding table (float32 by default).

    out_dtype=jnp.bfloat16 halves HBM write bytes but changes the PyTorch f32 contract;
    keep the default unless the consumer adds the PE to bf16 activations.
    """
    assert d_model % 2 == 0, "d_model must be even (sin/cos interleave)"
    assert length >= 1

    pack = _pick_pack(d_model)
    width = pack * d_model
    num_rows = pl.cdiv(length, pack)               # slab rows actually needed (no padding)

    # ---- column-dependent tables, (1, width), computed once on host ----
    col = np.arange(width, dtype=np.int64)
    c_pos = col // d_model                         # which packed position within a slab row
    c_feat = col - c_pos * d_model                 # feature index j in [0, d_model)
    pair = (c_feat // 2).astype(np.float32)        # i = j // 2
    freq = np.exp(pair * (-2.0 * math.log(10000.0) / float(d_model))).astype(np.float32)
    phase = (c_feat % 2).astype(np.float32) * np.float32(math.pi / 2.0)  # cos = sin(x+pi/2)
    off = (c_pos.astype(np.float32) * freq + phase).astype(np.float32)
    freq = jnp.asarray(freq.reshape(1, width))
    off = jnp.asarray(off.reshape(1, width))

    # ---- output block sizing: ~4 MiB blocks, but keep >=2 (ideally ~8) grid steps ----
    bytes_per_row = width * 4
    target_bytes = 4 << 20                         # 2x-buffered = 8 MiB: fits scoped VMEM everywhere
    tile_by_bytes = max(8, (target_bytes // bytes_per_row) // 8 * 8)
    tile_eighth = _round_up(pl.cdiv(num_rows, 8), 8)   # ~8 steps if blocks stay >= 1 MiB
    tile_half = _round_up(pl.cdiv(num_rows, 2), 8)     # otherwise at least 2 steps (v7x megacore)
    split_cap = tile_eighth if tile_eighth * bytes_per_row >= (1 << 20) else tile_half
    tile = max(8, min(tile_by_bytes, split_cap))
    if tile >= num_rows:
        tile = num_rows                            # single block == full array dims (always legal)
    n_tiles = pl.cdiv(num_rows, tile)

    slab = pl.pallas_call(
        partial(_pe_kernel, pack=pack),
        out_shape=jax.ShapeDtypeStruct((num_rows, width), out_dtype),
        grid_spec=pltpu.PrefetchScalarGridSpec(
            num_scalar_prefetch=0,
            grid=(n_tiles,),
            in_specs=[
                pl.BlockSpec((1, width), lambda i: (0, 0)),   # freq: grid-constant, stays in VMEM
                pl.BlockSpec((1, width), lambda i: (0, 0)),   # off:  grid-constant, stays in VMEM
            ],
            out_specs=pl.BlockSpec((tile, width), lambda i: (i, 0)),
        ),
        compiler_params=pltpu.CompilerParams(
            dimension_semantics=("parallel",),     # shards grid steps across v7x's 2 TensorCores
        ),
    )(freq, off)

    # Free row-major reshape to (num_rows*pack, d_model); tiny tail slice only if pack
    # does not divide length (never happens when pack == 1).
    pe = slab.reshape(num_rows * pack, d_model)
    if num_rows * pack != length:
        pe = pe[:length]
    return pe[None, :, :]


def _reference(length: int, d_model: int) -> jnp.ndarray:
    # Pure-JAX reference mirroring the PyTorch __init__ construction.
    position = jnp.arange(0, length, dtype=jnp.float32)[:, None]
    div_term = jnp.exp(
        jnp.arange(0, d_model, 2, dtype=jnp.float32) * -(math.log(10000.0) / d_model)
    )
    pe = jnp.zeros((length, d_model), dtype=jnp.float32)
    pe = pe.at[:, 0::2].set(jnp.sin(position * div_term))
    pe = pe.at[:, 1::2].set(jnp.cos(position * div_term))
    return pe[None, :, :]


if __name__ == "__main__":
    # forward() takes an int `length` (no tensor inputs); key kept for determinism
    # convention only.
    _ = jax.random.PRNGKey(0)

    cases = [
        (8, 32),     # packed path (pack=4, width=128), single full-array block
        (100, 256),  # pack=1, partial final output block, no padding / no tail slice
        (33, 80),    # generalized packing (pack=8, width=640), 7-position tail slice
    ]
    for length, d_model in cases:
        out = jax.block_until_ready(positional_encoding(length, d_model=d_model))
        ref = _reference(length, d_model)
        assert out.shape == (1, length, d_model), (out.shape, length, d_model)
        assert out.dtype == jnp.float32, out.dtype
        assert jnp.allclose(out, ref, atol=5e-5, rtol=1e-5), f"mismatch (L={length}, d={d_model})"

    print("KERNEL_OK")
</pallas_src>

<mosaic_0001>
module attributes {stable_mosaic.version = 11 : i64} {
  func.func @_pe_kernel(%arg0: i32, %arg1: memref<1x128xf32, #tpu.memory_space<vmem>>, %arg2: memref<1x128xf32, #tpu.memory_space<vmem>>, %arg3: memref<2x128xf32, #tpu.memory_space<vmem>>) attributes {dimension_semantics = [#tpu.dimension_semantics<parallel>], iteration_bounds = array<i64: 1>, scalar_prefetch = 0 : i64, scratch_operands = 0 : i64, tpu.core_type = #tpu.core_type<tc>, window_params = [{pipeline_mode = #tpu.pipeline_mode<synchronous>, transform_indices = @transform_0, window_bounds = array<i64: 1, 128>}, {pipeline_mode = #tpu.pipeline_mode<synchronous>, transform_indices = @transform_1, window_bounds = array<i64: 1, 128>}, {transform_indices = @transform_2, window_bounds = array<i64: 2, 128>}]} {
    %c2_i32 = arith.constant 2 : i32
    %0 = arith.muli %arg0, %c2_i32 : i32
    %1 = tpu.iota {dimensions = array<i32: 0>} : vector<2x1xi32>
    %2 = vector.broadcast %0 : i32 to vector<2x1xi32>
    %3 = arith.addi %1, %2 : vector<2x1xi32>
    %4 = arith.sitofp %3 : vector<2x1xi32> to vector<2x1xf32>
    %cst = arith.constant 4.000000e+00 : f32
    %5 = vector.broadcast %cst : f32 to vector<2x1xf32>
    %6 = arith.mulf %4, %5 : vector<2x1xf32>
    %c0 = arith.constant 0 : index
    %c0_0 = arith.constant 0 : index
    %7 = vector.load %arg1[%c0, %c0_0] : memref<1x128xf32, #tpu.memory_space<vmem>>, vector<1x128xf32>
    %8 = vector.broadcast %6 : vector<2x1xf32> to vector<2x128xf32>
    %9 = vector.broadcast %7 : vector<1x128xf32> to vector<2x128xf32>
    %10 = arith.mulf %8, %9 : vector<2x128xf32>
    %c0_1 = arith.constant 0 : index
    %c0_2 = arith.constant 0 : index
    %11 = vector.load %arg2[%c0_1, %c0_2] : memref<1x128xf32, #tpu.memory_space<vmem>>, vector<1x128xf32>
    %12 = vector.broadcast %11 : vector<1x128xf32> to vector<2x128xf32>
    %13 = arith.addf %10, %12 : vector<2x128xf32>
    %14 = math.sin %13 : vector<2x128xf32>
    %c0_3 = arith.constant 0 : index
    %c0_4 = arith.constant 0 : index
    %15 = vector.load %arg3[%c0_3, %c0_4] : memref<2x128xf32, #tpu.memory_space<vmem>>, vector<2x128xf32>
    tpu.vector_store %arg3[%c0_3, %c0_4], %14 {strides = array<i32>} : memref<2x128xf32, #tpu.memory_space<vmem>>, vector<2x128xf32>,
    return
  }
  func.func @transform_0(%arg0: i32) -> (i32, i32) {
    %c0_i32 = arith.constant 0 : i32
    %c0_i32_0 = arith.constant 0 : i32
    %c0_i32_1 = arith.constant 0 : i32
    return %c0_i32, %c0_i32_0 : i32, i32
  }
  func.func @transform_1(%arg0: i32) -> (i32, i32) {
    %c0_i32 = arith.constant 0 : i32
    %c0_i32_0 = arith.constant 0 : i32
    %c0_i32_1 = arith.constant 0 : i32
    return %c0_i32, %c0_i32_0 : i32, i32
  }
  func.func @transform_2(%arg0: i32) -> (i32, i32) {
    %c0_i32 = arith.constant 0 : i32
    %c0_i32_0 = arith.constant 0 : i32
    return %arg0, %c0_i32 : i32, i32
  }
}

</mosaic_0001>

<llo_original>
// kernel: tpu_custom_call.1
$region0: #{tpu_custom_call.1}
  #allocation0 [shape = 'u32[]', space=smem, size = 0x4, offset = 0x4, fixed_abs, tag = 'smem constant byte address 0x4 - core index']
  #allocation1 [shape = 'u32[144,128]{1,0:T(1,128)}', space=vmem, size = 0x12000, scoped, tag = 'internal scratch']
  %s0 = inlined_call_operand.hbm [shape: f32[1,128], index: 0, kind: input, shape index: {}]
  %s1 = inlined_call_operand.vmem [shape: f32[1,128], index: 1, kind: input, shape index: {}]
  %s2 = inlined_call_operand.hbm [shape: f32[2,128], index: 2, kind: output, shape index: {}]
  %s3 = sld [smem:[#allocation0]]
  $region22: #{tpu_custom_call.1} parent=0
    _
  %s5 = ssub.s32 1, %s3
  %s6 = scalar_select 0, %s5, %s3
  $region1: #{tpu_custom_call.1} parent=0
    #allocation2 [shape = 'u8[512]{0}', space=vmem, size = 0x400, scoped, tag = 'input window, operand 0, single buffered']
    #allocation3 [shape = 's32[1]{0}', space=sflag, size = 0x4, scoped, tag = 'scoped memory for tpu_custom_call.1']
    #allocation4 [shape = 's32[1]{0}', space=sflag, size = 0x4, scoped, tag = 'scoped memory for tpu_custom_call.1']
    #allocation5 [shape = 'u8[1024]{0}', space=vmem, size = 0x400, scoped, tag = 'output window, operand 0, single buffered']
    %7 = vsyncpa [#allocation3], 0
    %8 = vsyncpa [#allocation4], 0
    // Predicated region
    $region2: #{tpu_custom_call.1} parent=1 // pred_check
      _
    $region3: #{tpu_custom_call.1} parent=1 // pred_check_branch
      %10 = sbr.rel (0) target = $region5
    $region4: #{tpu_custom_call.1} parent=1 // pred_region
      %s12 = ssub.s32 16, 16
      %13 = vsyncadd [#allocation3], %s12
      %s15 = sshll.u32 [#allocation2], 4
      %s16 = int_to_ptr.vmem [resolvable:$true] %s15
      %18 = dma.hbm_to_vmem [thread:$0]  %s0, 16, %s16, [#allocation3]
    $region5: #{tpu_custom_call.1} parent=1 // pred_fallthru
      _
    // Predicated region
    $region6: #{tpu_custom_call.1} parent=1 // pred_check
      _
    $region7: #{tpu_custom_call.1} parent=1 // pred_check_branch
      %20 = sbr.rel (0) target = $region9
    $region8: #{tpu_custom_call.1} parent=1 // pred_region
      _
    $region9: #{tpu_custom_call.1} parent=1 // pred_fallthru
      _
    // Predicated region
    $region10: #{tpu_custom_call.1} parent=1 // pred_check
      _
    $region11: #{tpu_custom_call.1} parent=1 // pred_check_branch
      %22 = sbr.rel (0) target = $region13
    $region12: #{tpu_custom_call.1} parent=1 // pred_region
      %23 = dma.done [#allocation3], 16
    $region13: #{tpu_custom_call.1} parent=1 // pred_fallthru
      _
    %s24 = smul.u32 0, 2
    %v25 = vlaneseq
    %v26 = vshrl.u32 %v25, 7
    %v27 = vstv %s24
    %v28 = vadd.s32 %v26, %v27
    %v29 = vcvt.s32.f32 %v28
    %v30 = vmul.f32 %v29, 4.0
    %v31 = vld [vmem:[#allocation2] sm:$0x1]
    %v33 = vlaneseq
    %v34 = vshrl.u32 %v33, 7
    %v35 = vsub.s32 0, %v34
    %v36 = vrot.slane %v31, %v35
    %v38 = vmul.f32 %v30, %v36
    %v39 = vld [vmem:[%s1] sm:$0x1]
    %v41 = vlaneseq
    %v42 = vshrl.u32 %v41, 7
    %v43 = vsub.s32 0, %v42
    %v44 = vrot.slane %v39, %v43
    %v46 = vadd.f32 %v38, %v44
    %v47 = vand.u32 2147483647, %v46
    %vm48 = vcmp.le.f32.partialorder %v47, 0.7853982
    %vm49 = vcmp.lt.s32.totalorder %v46, 0
    %v50 = vand.u32 %v46, 2139095040
    %v51 = vshrl.u32 %v50, 23
    %v52 = vsub.s32 %v51, 127
    %v53 = vand.u32 2147483647, %v46
    %v54 = vand.u32 %v53, 8388607
    %v55 = vor.u32 %v54, 8388608
    %v56 = vsub.s32 0, %v55
    %v57 = vadd.s32 %v52, 1
    %vm58 = vcmp.gt.s32.totalorder %v57, 0
    %v59 = vsel %vm58, %v57, 0
    %v60 = vshrl.u32 %v59, 5
    %v61 = vand.u32 %v59, 31
    %v62 = vsub.s32 32, %v61
    %v63 = vshrl.u32 683565275, %v62
    %v64 = vshll.u32 683565275, %v61
    %v65 = vshrl.u32 2475754826, %v62
    %v66 = vor.u32 %v64, %v65
    %v67 = vshll.u32 2475754826, %v61
    %v68 = vshrl.u32 2131351028, %v62
    %v69 = vor.u32 %v67, %v68
    %v70 = vshll.u32 2131351028, %v61
    %v71 = vshrl.u32 2102212464, %v62
    %v72 = vor.u32 %v70, %v71
    %v73 = vshll.u32 2102212464, %v61
    %v74 = vshrl.u32 920167782, %v62
    %v75 = vor.u32 %v73, %v74
    %v76 = vshll.u32 920167782, %v61
    %v77 = vshrl.u32 1326507024, %v62
    %v78 = vor.u32 %v76, %v77
    %vm79 = vcmp.lt.s32.totalorder %v60, 1
    %vm80 = vcmp.lt.s32.totalorder %v60, 2
    %vm81 = vcmp.lt.s32.totalorder %v60, 3
    %vm82 = vcmp.lt.s32.totalorder %v60, 4
    %v83 = vsel %vm79, %v63, %v66
    %v84 = vsel %vm82, %v72, 2102212464
    %v85 = vsel %vm81, %v69, %v84
    %v86 = vsel %vm80, %v83, %v85
    %v87 = vsel %vm79, %v66, %v69
    %v88 = vsel %vm82, %v75, 920167782
    %v89 = vsel %vm81, %v72, %v88
    %v90 = vsel %vm80, %v87, %v89
    %v91 = vsel %vm79, %v69, %v72
    %v92 = vsel %vm82, %v78, 1326507024
    %v93 = vsel %vm81, %v75, %v92
    %v94 = vsel %vm80, %v91, %v93
    %v95 = vshll.u32 %v55, 8
    %v96 = vmul.u32.u64.compose %v95, %v94
    %v97 = vextract.low.u32 %v96
    %v98 = vextract.high.u32 %v96
    %v99 = vmul.u32.u64.compose %v95, %v90
    %v100 = vextract.low.u32 %v99
    %v101 = vextract.high.u32 %v99
    %v102 = vmul.u32 %v95, %v86
    %v103 = vadd.s32 %v98, %v100
    %vm104 = vc.u32 %v98, %v100
    %v105 = vadd.s32 %v101, 1
    %v106 = vsel %vm104, %v105, %v101
    %v107 = vadd.s32 %v102, %v106
    %v108 = vadd.s32 %v107, 536870912
    %v109 = vshrl.u32 %v108, 30
    %v110 = vshll.u32 %v109, 30
    %v111 = vsub.s32 %v107, %v110
    %vm112 = vcmp.lt.s32.totalorder %v111, 0
    %v113 = vsub.s32 0, %v111
    %v114 = vsel %vm112, %v113, %v111
    %v115 = vclz %v114
    %v116 = vsub.s32 %v115, 2
    %vm117 = vcmp.gt.s32.totalorder 0, %v116
    %v118 = vsel %vm117, 0, %v116
    %v119 = vsub.s32 32, %v118
    %v120 = vshll.u32 %v111, %v118
    %v121 = vshrl.u32 %v103, %v119
    %v122 = vor.u32 %v120, %v121
    %v123 = vsub.s32 4294967266, %v118
    %v124 = vadd.s32 %v123, 127
    %v125 = vshll.u32 %v124, 23
    %v126 = vor.u32 4788187, %v125
    %v127 = vand.u32 2147483647, %v126
    %v129 = vcvt.s32.f32 %v122
    %v130 = vmul.f32 %v129, %v127
    %v131 = vxor.u32 %v130, 2147483648
    %v132 = vsel %vm49, %v131, %v130
    %v133 = vsub.s32 4, %v109
    %v134 = vsel %vm49, %v133, %v109
    %v135 = vsel %vm48, %v46, %v132
    %v136 = vsel %vm48, 0, %v134
    %v137 = vcosq.f32.pop %v135
    %v138 = vsinq.f32.pop %v135
    %vm139 = vweird.f32 %v46
    %v140 = vadd.s32 %v136, 3
    %v141 = vand.u32 %v140, 3
    %vm142 = vcmp.lt.s32.totalorder %v141, 2
    %vm143 = vcmp.eq.s32.totalorder %v141, 0
    %v144 = vxor.u32 %v138, 2147483648
    %v145 = vsel %vm143, %v137, %v144
    %vm146 = vcmp.eq.s32.totalorder %v141, 2
    %v147 = vxor.u32 %v137, 2147483648
    %v148 = vsel %vm146, %v147, %v138
    %v149 = vsel %vm142, %v145, %v148
    %v150 = vsel %vm139, nan, %v149
    %151 = vst [vmem:[#allocation5] sm:$0x3] %v150
    // Predicated region
    $region14: #{tpu_custom_call.1} parent=1 // pred_check
      _
    $region15: #{tpu_custom_call.1} parent=1 // pred_check_branch
      %153 = sbr.rel (0) target = $region17
    $region16: #{tpu_custom_call.1} parent=1 // pred_region
      %s155 = ssub.s32 32, 32
      %156 = vsyncadd [#allocation4], %s155
      %s158 = sshll.u32 [#allocation5], 4
      %s159 = int_to_ptr.vmem [resolvable:$true] %s158
      %161 = dma.vmem_to_hbm [thread:$0]  %s159, 32, %s2, [#allocation4]
    $region17: #{tpu_custom_call.1} parent=1 // pred_fallthru
      _
    // Predicated region
    $region18: #{tpu_custom_call.1} parent=1 // pred_check
      _
    $region19: #{tpu_custom_call.1} parent=1 // pred_check_branch
      %163 = sbr.rel (0) target = $region21
    $region20: #{tpu_custom_call.1} parent=1 // pred_region
      %164 = dma.done [#allocation4], 32
    $region21: #{tpu_custom_call.1} parent=1 // pred_fallthru
      _
    %165 = vsyncpa [#allocation3], 1
    %166 = vsyncpa [#allocation4], 1

</llo_original>
